<compile_context>
chip_gen: v7x
topology: tpu7x:2x2x1
jax: 0.10.0
libtpu: 0.0.40
codegen_flags: <defaults>
</compile_context>

<pallas_src>
import jax
import jax.numpy as jnp
from jax.experimental import pallas as pl
from jax.experimental.pallas import tpu as pltpu

_LANE = 128


def _mlp_kernel(x_ref,
                w1_ref, b1_ref,
                w2_ref, b2_ref,
                w3_ref, b3_ref,
                w45_ref, b45_ref,
                o_ref):
    """Fused 4-matmul MLP on one [features, TILE_B] column block.

    Transposed layout: batch on the lane axis.  Activations are kept in the
    compute dtype (f32 or bf16); matmuls accumulate in f32 on the MXU; biases
    stay f32.
    """
    cdt = x_ref.dtype
    x = x_ref[...]

    # layer 1 + ReLU : [64, d_pad] @ [d_pad, TB] -> [64, TB]
    h = jnp.dot(w1_ref[...], x, preferred_element_type=jnp.float32)
    h = jnp.maximum(h + b1_ref[...], 0.0).astype(cdt)

    # layer 2 + ReLU : [32, 64] @ [64, TB] -> [32, TB]
    h = jnp.dot(w2_ref[...], h, preferred_element_type=jnp.float32)
    h = jnp.maximum(h + b2_ref[...], 0.0).astype(cdt)

    # layer 3 + ReLU : [32, 32] @ [32, TB] -> [32, TB]
    h = jnp.dot(w3_ref[...], h, preferred_element_type=jnp.float32)
    h = jnp.maximum(h + b3_ref[...], 0.0).astype(cdt)

    # fused layers 4+5 (exact, no nonlinearity between): [out, 32] @ [32, TB]
    out = jnp.dot(w45_ref[...], h, preferred_element_type=jnp.float32)
    out = out + b45_ref[...]

    o_ref[...] = out.astype(o_ref.dtype)


def mlp_forward(x, params, *, compute_dtype=jnp.float32, tile_b=512):
    """x: [B, input_dim] float32; params: PyTorch-convention w:[in,out], b:[1,out]."""
    assert tile_b % _LANE == 0, "tile_b must be a multiple of 128 (lane width)"
    B, din = x.shape
    out_dim = params["w5"].shape[1]

    # ---- one-time parameter preparation (wrapper-side layout plumbing) ----
    # Exact algebraic fusion of linear4/linear5.
    w45 = params["w4"] @ params["w5"]                      # [32, out]
    b45 = params["b4"] @ params["w5"] + params["b5"]       # [1, out]

    d_pad = max(8, ((din + 7) // 8) * 8)                   # 9 -> 16 features
    w1_pad = jnp.zeros((d_pad, 64), jnp.float32).at[:din].set(params["w1"])

    # Transposed layout: weights [out, in], biases [out, 1].
    w1t = w1_pad.T.astype(compute_dtype)                   # [64, d_pad]
    w2t = params["w2"].T.astype(compute_dtype)             # [32, 64]
    w3t = params["w3"].T.astype(compute_dtype)             # [32, 32]
    w45t = w45.T.astype(compute_dtype)                     # [out, 32]
    b1t = params["b1"].T.astype(jnp.float32)               # [64, 1]
    b2t = params["b2"].T.astype(jnp.float32)               # [32, 1]
    b3t = params["b3"].T.astype(jnp.float32)               # [32, 1]
    b45t = b45.T.astype(jnp.float32)                       # [out, 1]

    # ---- batch padding / tiling: batch rides the lane axis ----
    b_pad = max(_LANE, pl.cdiv(B, _LANE) * _LANE)
    tile = min(tile_b, b_pad)
    b_pad = pl.cdiv(b_pad, tile) * tile                    # make divisible by tile
    grid = (b_pad // tile,)

    xt = jnp.zeros((d_pad, b_pad), compute_dtype)
    xt = xt.at[:din, :B].set(x.T.astype(compute_dtype))    # [d_pad, b_pad]

    resident = lambda i: (0, 0)   # weights/biases stay VMEM-resident across the grid
    out_t = pl.pallas_call(
        _mlp_kernel,
        out_shape=jax.ShapeDtypeStruct((out_dim, b_pad), jnp.float32),
        grid=grid,
        in_specs=[
            pl.BlockSpec((d_pad, tile), lambda i: (0, i)),  # x: tiled over batch
            pl.BlockSpec(w1t.shape, resident),
            pl.BlockSpec(b1t.shape, resident),
            pl.BlockSpec(w2t.shape, resident),
            pl.BlockSpec(b2t.shape, resident),
            pl.BlockSpec(w3t.shape, resident),
            pl.BlockSpec(b3t.shape, resident),
            pl.BlockSpec(w45t.shape, resident),
            pl.BlockSpec(b45t.shape, resident),
        ],
        out_specs=pl.BlockSpec((out_dim, tile), lambda i: (0, i)),
        compiler_params=pltpu.CompilerParams(
            dimension_semantics=("parallel",)),
    )(xt, w1t, b1t, w2t, b2t, w3t, b3t, w45t, b45t)

    return out_t[:, :B].T                                  # back to [B, out_dim]


def init_params(key, input_dim, output_dim):
    """Deterministic synthetic init; weights stored as [in, out] (PyTorch math)."""
    dims = [(input_dim, 64), (64, 32), (32, 32), (32, 16), (16, output_dim)]
    params = {}
    for i, (din, dout) in enumerate(dims, start=1):
        key, kw, kb = jax.random.split(key, 3)
        scale = 1.0 / jnp.sqrt(float(din))
        params[f"w{i}"] = (jax.random.uniform(kw, (din, dout), jnp.float32,
                                              -1.0, 1.0) * scale)
        params[f"b{i}"] = (jax.random.uniform(kb, (1, dout), jnp.float32,
                                              -1.0, 1.0) * scale)
    return params


def reference_forward(x, params):
    h = jnp.maximum(x @ params["w1"] + params["b1"], 0.0)
    h = jnp.maximum(h @ params["w2"] + params["b2"], 0.0)
    h = jnp.maximum(h @ params["w3"] + params["b3"], 0.0)
    h = h @ params["w4"] + params["b4"]
    h = h @ params["w5"] + params["b5"]
    return h


if __name__ == "__main__":
    key = jax.random.PRNGKey(0)
    key, kx = jax.random.split(key)

    # dacon ddarung: 9 input features, 1 regression target ("count")
    input_dim, output_dim, batch = 9, 1, 8
    x = jax.random.normal(kx, (batch, input_dim), jnp.float32)
    params = init_params(key, input_dim, output_dim)

    ref = reference_forward(x, params)

    # f32 path (default): strict check against the pure-JAX reference.
    out = jax.block_until_ready(mlp_forward(x, params))
    assert out.shape == (batch, output_dim)
    assert jnp.allclose(out, ref, atol=1e-4, rtol=1e-4), "f32 mismatch vs reference"

    # bf16 compute path (recommended on v6e/v7x): f32 accumulation, loose check.
    out_bf16 = jax.block_until_ready(
        mlp_forward(x, params, compute_dtype=jnp.bfloat16))
    assert out_bf16.shape == (batch, output_dim)
    assert jnp.allclose(out_bf16, ref, atol=1e-1, rtol=1e-1), "bf16 mismatch vs reference"

    print("KERNEL_OK")
</pallas_src>

<mosaic_0001>
module attributes {stable_mosaic.version = 11 : i64} {
  func.func @_mlp_kernel(%arg0: i32, %arg1: memref<16x128xf32, #tpu.memory_space<vmem>>, %arg2: memref<64x16xf32, #tpu.memory_space<vmem>>, %arg3: memref<64x1xf32, #tpu.memory_space<vmem>>, %arg4: memref<32x64xf32, #tpu.memory_space<vmem>>, %arg5: memref<32x1xf32, #tpu.memory_space<vmem>>, %arg6: memref<32x32xf32, #tpu.memory_space<vmem>>, %arg7: memref<32x1xf32, #tpu.memory_space<vmem>>, %arg8: memref<1x32xf32, #tpu.memory_space<vmem>>, %arg9: memref<1x1xf32, #tpu.memory_space<vmem>>, %arg10: memref<1x128xf32, #tpu.memory_space<vmem>>) attributes {dimension_semantics = [#tpu.dimension_semantics<parallel>], iteration_bounds = array<i64: 1>, scalar_prefetch = 0 : i64, scratch_operands = 0 : i64, tpu.core_type = #tpu.core_type<tc>, window_params = [{transform_indices = @transform_0, window_bounds = array<i64: 16, 128>}, {pipeline_mode = #tpu.pipeline_mode<synchronous>, transform_indices = @transform_1, window_bounds = array<i64: 64, 16>}, {pipeline_mode = #tpu.pipeline_mode<synchronous>, transform_indices = @transform_2, window_bounds = array<i64: 64, 1>}, {pipeline_mode = #tpu.pipeline_mode<synchronous>, transform_indices = @transform_3, window_bounds = array<i64: 32, 64>}, {pipeline_mode = #tpu.pipeline_mode<synchronous>, transform_indices = @transform_4, window_bounds = array<i64: 32, 1>}, {pipeline_mode = #tpu.pipeline_mode<synchronous>, transform_indices = @transform_5, window_bounds = array<i64: 32, 32>}, {pipeline_mode = #tpu.pipeline_mode<synchronous>, transform_indices = @transform_6, window_bounds = array<i64: 32, 1>}, {pipeline_mode = #tpu.pipeline_mode<synchronous>, transform_indices = @transform_7, window_bounds = array<i64: 1, 32>}, {pipeline_mode = #tpu.pipeline_mode<synchronous>, transform_indices = @transform_8, window_bounds = array<i64: 1, 1>}, {transform_indices = @transform_9, window_bounds = array<i64: 1, 128>}]} {
    %c0 = arith.constant 0 : index
    %c0_0 = arith.constant 0 : index
    %0 = vector.load %arg1[%c0, %c0_0] : memref<16x128xf32, #tpu.memory_space<vmem>>, vector<16x128xf32>
    %c0_1 = arith.constant 0 : index
    %c0_2 = arith.constant 0 : index
    %1 = vector.load %arg2[%c0_1, %c0_2] : memref<64x16xf32, #tpu.memory_space<vmem>>, vector<64x16xf32>
    %cst = arith.constant dense<0.000000e+00> : vector<64x128xf32>
    %2 = tpu.matmul %1, %0, %cst {dimension_numbers = #tpu.dot_dimension_numbers<[1], [0], [0], [1], [0, 0, 1, 1], [], []>} : vector<64x16xf32>, vector<16x128xf32>, vector<64x128xf32> -> vector<64x128xf32>
    %c0_3 = arith.constant 0 : index
    %c0_4 = arith.constant 0 : index
    %3 = vector.load %arg3[%c0_3, %c0_4] : memref<64x1xf32, #tpu.memory_space<vmem>>, vector<64x1xf32>
    %4 = vector.broadcast %3 : vector<64x1xf32> to vector<64x128xf32>
    %5 = arith.addf %2, %4 : vector<64x128xf32>
    %cst_5 = arith.constant 0.000000e+00 : f32
    %6 = vector.broadcast %cst_5 : f32 to vector<64x128xf32>
    %7 = arith.maximumf %5, %6 : vector<64x128xf32>
    %c0_6 = arith.constant 0 : index
    %c0_7 = arith.constant 0 : index
    %8 = vector.load %arg4[%c0_6, %c0_7] : memref<32x64xf32, #tpu.memory_space<vmem>>, vector<32x64xf32>
    %cst_8 = arith.constant dense<0.000000e+00> : vector<32x128xf32>
    %9 = tpu.matmul %8, %7, %cst_8 {dimension_numbers = #tpu.dot_dimension_numbers<[1], [0], [0], [1], [0, 0, 1, 1], [], []>} : vector<32x64xf32>, vector<64x128xf32>, vector<32x128xf32> -> vector<32x128xf32>
    %c0_9 = arith.constant 0 : index
    %c0_10 = arith.constant 0 : index
    %10 = vector.load %arg5[%c0_9, %c0_10] : memref<32x1xf32, #tpu.memory_space<vmem>>, vector<32x1xf32>
    %11 = vector.broadcast %10 : vector<32x1xf32> to vector<32x128xf32>
    %12 = arith.addf %9, %11 : vector<32x128xf32>
    %cst_11 = arith.constant 0.000000e+00 : f32
    %13 = vector.broadcast %cst_11 : f32 to vector<32x128xf32>
    %14 = arith.maximumf %12, %13 : vector<32x128xf32>
    %c0_12 = arith.constant 0 : index
    %c0_13 = arith.constant 0 : index
    %15 = vector.load %arg6[%c0_12, %c0_13] : memref<32x32xf32, #tpu.memory_space<vmem>>, vector<32x32xf32>
    %cst_14 = arith.constant dense<0.000000e+00> : vector<32x128xf32>
    %16 = tpu.matmul %15, %14, %cst_14 {dimension_numbers = #tpu.dot_dimension_numbers<[1], [0], [0], [1], [0, 0, 1, 1], [], []>} : vector<32x32xf32>, vector<32x128xf32>, vector<32x128xf32> -> vector<32x128xf32>
    %c0_15 = arith.constant 0 : index
    %c0_16 = arith.constant 0 : index
    %17 = vector.load %arg7[%c0_15, %c0_16] : memref<32x1xf32, #tpu.memory_space<vmem>>, vector<32x1xf32>
    %18 = vector.broadcast %17 : vector<32x1xf32> to vector<32x128xf32>
    %19 = arith.addf %16, %18 : vector<32x128xf32>
    %cst_17 = arith.constant 0.000000e+00 : f32
    %20 = vector.broadcast %cst_17 : f32 to vector<32x128xf32>
    %21 = arith.maximumf %19, %20 : vector<32x128xf32>
    %c0_18 = arith.constant 0 : index
    %c0_19 = arith.constant 0 : index
    %22 = vector.load %arg8[%c0_18, %c0_19] : memref<1x32xf32, #tpu.memory_space<vmem>>, vector<1x32xf32>
    %cst_20 = arith.constant dense<0.000000e+00> : vector<1x128xf32>
    %23 = tpu.matmul %22, %21, %cst_20 {dimension_numbers = #tpu.dot_dimension_numbers<[1], [0], [0], [1], [0, 0, 1, 1], [], []>} : vector<1x32xf32>, vector<32x128xf32>, vector<1x128xf32> -> vector<1x128xf32>
    %c0_21 = arith.constant 0 : index
    %c0_22 = arith.constant 0 : index
    %24 = vector.load %arg9[%c0_21, %c0_22] : memref<1x1xf32, #tpu.memory_space<vmem>>, vector<1x1xf32>
    %25 = vector.broadcast %24 : vector<1x1xf32> to vector<1x128xf32>
    %26 = arith.addf %23, %25 : vector<1x128xf32>
    %c0_23 = arith.constant 0 : index
    %c0_24 = arith.constant 0 : index
    %27 = vector.load %arg10[%c0_23, %c0_24] : memref<1x128xf32, #tpu.memory_space<vmem>>, vector<1x128xf32>
    tpu.vector_store %arg10[%c0_23, %c0_24], %26 {strides = array<i32>} : memref<1x128xf32, #tpu.memory_space<vmem>>, vector<1x128xf32>,
    return
  }
  func.func @transform_0(%arg0: i32) -> (i32, i32) {
    %c0_i32 = arith.constant 0 : i32
    %c0_i32_0 = arith.constant 0 : i32
    return %c0_i32, %arg0 : i32, i32
  }
  func.func @transform_1(%arg0: i32) -> (i32, i32) {
    %c0_i32 = arith.constant 0 : i32
    %c0_i32_0 = arith.constant 0 : i32
    %c0_i32_1 = arith.constant 0 : i32
    return %c0_i32, %c0_i32_0 : i32, i32
  }
  func.func @transform_2(%arg0: i32) -> (i32, i32) {
    %c0_i32 = arith.constant 0 : i32
    %c0_i32_0 = arith.constant 0 : i32
    %c0_i32_1 = arith.constant 0 : i32
    return %c0_i32, %c0_i32_0 : i32, i32
  }
  func.func @transform_3(%arg0: i32) -> (i32, i32) {
    %c0_i32 = arith.constant 0 : i32
    %c0_i32_0 = arith.constant 0 : i32
    %c0_i32_1 = arith.constant 0 : i32
    return %c0_i32, %c0_i32_0 : i32, i32
  }
  func.func @transform_4(%arg0: i32) -> (i32, i32) {
    %c0_i32 = arith.constant 0 : i32
    %c0_i32_0 = arith.constant 0 : i32
    %c0_i32_1 = arith.constant 0 : i32
    return %c0_i32, %c0_i32_0 : i32, i32
  }
  func.func @transform_5(%arg0: i32) -> (i32, i32) {
    %c0_i32 = arith.constant 0 : i32
    %c0_i32_0 = arith.constant 0 : i32
    %c0_i32_1 = arith.constant 0 : i32
    return %c0_i32, %c0_i32_0 : i32, i32
  }
  func.func @transform_6(%arg0: i32) -> (i32, i32) {
    %c0_i32 = arith.constant 0 : i32
    %c0_i32_0 = arith.constant 0 : i32
    %c0_i32_1 = arith.constant 0 : i32
    return %c0_i32, %c0_i32_0 : i32, i32
  }
  func.func @transform_7(%arg0: i32) -> (i32, i32) {
    %c0_i32 = arith.constant 0 : i32
    %c0_i32_0 = arith.constant 0 : i32
    %c0_i32_1 = arith.constant 0 : i32
    return %c0_i32, %c0_i32_0 : i32, i32
  }
  func.func @transform_8(%arg0: i32) -> (i32, i32) {
    %c0_i32 = arith.constant 0 : i32
    %c0_i32_0 = arith.constant 0 : i32
    %c0_i32_1 = arith.constant 0 : i32
    return %c0_i32, %c0_i32_0 : i32, i32
  }
  func.func @transform_9(%arg0: i32) -> (i32, i32) {
    %c0_i32 = arith.constant 0 : i32
    %c0_i32_0 = arith.constant 0 : i32
    return %c0_i32, %arg0 : i32, i32
  }
}

</mosaic_0001>

<llo_original>
// kernel: tpu_custom_call.1
$region0: #{tpu_custom_call.1}
  #allocation0 [shape = 'u32[]', space=smem, size = 0x4, offset = 0x4, fixed_abs, tag = 'smem constant byte address 0x4 - core index']
  #allocation1 [shape = 'u32[144,128]{1,0:T(1,128)}', space=vmem, size = 0x12000, scoped, tag = 'internal scratch']
  #allocation2 [shape = 'f32[1,1]{1,0:T(1,128)S(1)}', space=vmem, size = 0x200, scoped, tag = 'scoped memory for tpu_custom_call.1']
  %s0 = inlined_call_operand.vmem [shape: f32[16,128], index: 0, kind: input, shape index: {}]
  %s1 = inlined_call_operand.vmem [shape: f32[64,16], index: 1, kind: input, shape index: {}]
  %s2 = inlined_call_operand.vmem [shape: f32[64,1], index: 2, kind: input, shape index: {}]
  %s3 = inlined_call_operand.vmem [shape: f32[32,64], index: 3, kind: input, shape index: {}]
  %s4 = inlined_call_operand.vmem [shape: f32[32,1], index: 4, kind: input, shape index: {}]
  %s5 = inlined_call_operand.vmem [shape: f32[32,32], index: 5, kind: input, shape index: {}]
  %s6 = inlined_call_operand.vmem [shape: f32[32,1], index: 6, kind: input, shape index: {}]
  %s7 = inlined_call_operand.vmem [shape: f32[1,32], index: 7, kind: input, shape index: {}]
  %s8 = inlined_call_operand.<no memory space> [shape: f32[1,1], index: 8, kind: input, shape index: {}]
  %s9 = inlined_call_operand.hbm [shape: f32[1,128], index: 9, kind: output, shape index: {}]
  %s10 = sld [smem:[#allocation0]]
  $region46: #{tpu_custom_call.1} parent=0
    _
  %s12 = ssub.s32 1, %s10
  %s13 = scalar_select 0, %s12, %s10
  %v14 = vstv %s8
  %15 = vst [vmem:[#allocation2] sm:$0x1] %v14
  $region1: #{tpu_custom_call.1} parent=0
    #allocation3 [shape = 'u8[512]{0}', space=vmem, size = 0x400, scoped, tag = 'output window, operand 0, single buffered']
    #allocation4 [shape = 's32[1]{0}', space=sflag, size = 0x4, scoped, tag = 'scoped memory for tpu_custom_call.1']
    %16 = vsyncpa [#allocation4], 0
    // Predicated region
    $region2: #{tpu_custom_call.1} parent=1 // pred_check
      _
    $region3: #{tpu_custom_call.1} parent=1 // pred_check_branch
      %18 = sbr.rel (0) target = $region5
    $region4: #{tpu_custom_call.1} parent=1 // pred_region
      _
    $region5: #{tpu_custom_call.1} parent=1 // pred_fallthru
      _
    // Predicated region
    $region6: #{tpu_custom_call.1} parent=1 // pred_check
      _
    $region7: #{tpu_custom_call.1} parent=1 // pred_check_branch
      %20 = sbr.rel (0) target = $region9
    $region8: #{tpu_custom_call.1} parent=1 // pred_region
      _
    $region9: #{tpu_custom_call.1} parent=1 // pred_fallthru
      _
    // Predicated region
    $region10: #{tpu_custom_call.1} parent=1 // pred_check
      _
    $region11: #{tpu_custom_call.1} parent=1 // pred_check_branch
      %22 = sbr.rel (0) target = $region13
    $region12: #{tpu_custom_call.1} parent=1 // pred_region
      _
    $region13: #{tpu_custom_call.1} parent=1 // pred_fallthru
      _
    // Predicated region
    $region14: #{tpu_custom_call.1} parent=1 // pred_check
      _
    $region15: #{tpu_custom_call.1} parent=1 // pred_check_branch
      %24 = sbr.rel (0) target = $region17
    $region16: #{tpu_custom_call.1} parent=1 // pred_region
      _
    $region17: #{tpu_custom_call.1} parent=1 // pred_fallthru
      _
    // Predicated region
    $region18: #{tpu_custom_call.1} parent=1 // pred_check
      _
    $region19: #{tpu_custom_call.1} parent=1 // pred_check_branch
      %26 = sbr.rel (0) target = $region21
    $region20: #{tpu_custom_call.1} parent=1 // pred_region
      _
    $region21: #{tpu_custom_call.1} parent=1 // pred_fallthru
      _
    // Predicated region
    $region22: #{tpu_custom_call.1} parent=1 // pred_check
      _
    $region23: #{tpu_custom_call.1} parent=1 // pred_check_branch
      %28 = sbr.rel (0) target = $region25
    $region24: #{tpu_custom_call.1} parent=1 // pred_region
      _
    $region25: #{tpu_custom_call.1} parent=1 // pred_fallthru
      _
    // Predicated region
    $region26: #{tpu_custom_call.1} parent=1 // pred_check
      _
    $region27: #{tpu_custom_call.1} parent=1 // pred_check_branch
      %30 = sbr.rel (0) target = $region29
    $region28: #{tpu_custom_call.1} parent=1 // pred_region
      _
    $region29: #{tpu_custom_call.1} parent=1 // pred_fallthru
      _
    // Predicated region
    $region30: #{tpu_custom_call.1} parent=1 // pred_check
      _
    $region31: #{tpu_custom_call.1} parent=1 // pred_check_branch
      %32 = sbr.rel (0) target = $region33
    $region32: #{tpu_custom_call.1} parent=1 // pred_region
      _
    $region33: #{tpu_custom_call.1} parent=1 // pred_fallthru
      _
    // Predicated region
    $region34: #{tpu_custom_call.1} parent=1 // pred_check
      _
    $region35: #{tpu_custom_call.1} parent=1 // pred_check_branch
      %34 = sbr.rel (0) target = $region37
    $region36: #{tpu_custom_call.1} parent=1 // pred_region
      _
    $region37: #{tpu_custom_call.1} parent=1 // pred_fallthru
      _
    %v35 = vld [vmem:[%s0] sm:$0xff]
    %v36 = vld [vmem:[%s0 + $0x8] sm:$0xff]
    %v37 = vld [vmem:[%s1] sm:$0xff]
    %v38 = vld [vmem:[%s1 + $0x8] sm:$0xff]
    %v39 = vld [vmem:[%s1 + $0x10] sm:$0xff]
    %v40 = vld [vmem:[%s1 + $0x18] sm:$0xff]
    %v41 = vld [vmem:[%s1 + $0x20] sm:$0xff]
    %v42 = vld [vmem:[%s1 + $0x28] sm:$0xff]
    %v43 = vld [vmem:[%s1 + $0x30] sm:$0xff]
    %v44 = vld [vmem:[%s1 + $0x38] sm:$0xff]
    %v45 = vld [vmem:[%s2] sm:$0xff]
    %v46 = vld [vmem:[%s2 + $0x8] sm:$0xff]
    %v47 = vld [vmem:[%s2 + $0x10] sm:$0xff]
    %v48 = vld [vmem:[%s2 + $0x18] sm:$0xff]
    %v49 = vld [vmem:[%s2 + $0x20] sm:$0xff]
    %v50 = vld [vmem:[%s2 + $0x28] sm:$0xff]
    %v51 = vld [vmem:[%s2 + $0x30] sm:$0xff]
    %v52 = vld [vmem:[%s2 + $0x38] sm:$0xff]
    %54 = vset.pattern.permute.xlu0 0
    %55 = vperm.xlu0 %54, %v45
    %v56 = vpop.permute.xlu0 %55
    %59 = vset.pattern.permute.xlu0 0
    %60 = vperm.xlu0 %59, %v46
    %v61 = vpop.permute.xlu0 %60
    %64 = vset.pattern.permute.xlu0 0
    %65 = vperm.xlu0 %64, %v47
    %v66 = vpop.permute.xlu0 %65
    %69 = vset.pattern.permute.xlu0 0
    %70 = vperm.xlu0 %69, %v48
    %v71 = vpop.permute.xlu0 %70
    %74 = vset.pattern.permute.xlu0 0
    %75 = vperm.xlu0 %74, %v49
    %v76 = vpop.permute.xlu0 %75
    %79 = vset.pattern.permute.xlu0 0
    %80 = vperm.xlu0 %79, %v50
    %v81 = vpop.permute.xlu0 %80
    %84 = vset.pattern.permute.xlu0 0
    %85 = vperm.xlu0 %84, %v51
    %v86 = vpop.permute.xlu0 %85
    %89 = vset.pattern.permute.xlu0 0
    %90 = vperm.xlu0 %89, %v52
    %v91 = vpop.permute.xlu0 %90
    %vm93 = vcmask 130048
    %v95 = vsel %vm93, %v37, 0
    %v98 = vsel %vm93, %v38, 0
    %v101 = vsel %vm93, %v39, 0
    %v104 = vsel %vm93, %v40, 0
    %v107 = vsel %vm93, %v41, 0
    %v110 = vsel %vm93, %v42, 0
    %v113 = vsel %vm93, %v43, 0
    %v116 = vsel %vm93, %v44, 0
    %118 = vmatprep.subr.mxu0 0.0
    %119 = vmatpush1.msra.mxu0 %v35
    %120 = vmatprep.subr.mxu0 0.0
    %121 = vmatpush1.msra.mxu0 %v36
    %122 = vmatprep.subr.mxu0 0.0
    %123 = vmatpush1.msra.mxu0 0.0
    %124 = vmatprep.subr.mxu0 0.0
    %125 = vmatpush1.msra.mxu0 0.0
    %126 = vmatprep.subr.mxu0 0.0
    %127 = vmatpush1.msra.mxu0 0.0
    %128 = vmatprep.subr.mxu0 0.0
    %129 = vmatpush1.msra.mxu0 0.0
    %130 = vmatprep.subr.mxu0 0.0
    %131 = vmatpush1.msra.mxu0 0.0
    %132 = vmatprep.subr.mxu0 0.0
    %133 = vmatpush1.msra.mxu0 0.0
    %134 = vmatprep.subr.mxu0 0.0
    %135 = vmatpush1.msra.mxu0 0.0
    %136 = vmatprep.subr.mxu0 0.0
    %137 = vmatpush1.msra.mxu0 0.0
    %138 = vmatprep.subr.mxu0 0.0
    %139 = vmatpush1.msra.mxu0 0.0
    %140 = vmatprep.subr.mxu0 0.0
    %141 = vmatpush1.msra.mxu0 0.0
    %142 = vmatprep.subr.mxu0 0.0
    %143 = vmatpush1.msra.mxu0 0.0
    %144 = vmatprep.subr.mxu0 0.0
    %145 = vmatpush1.msra.mxu0 0.0
    %146 = vmatprep.subr.mxu0 0.0
    %147 = vmatpush1.msra.mxu0 0.0
    %148 = vmatprep.subr.mxu0 0.0
    %149 = vmatpush1.msra.mxu0 0.0
    %150 = vmatprep.subr.mxu0 0.0
    %151 = vmatpush1.msra.mxu0 0.0
    %152 = vmatprep.subr.mxu0 0.0
    %153 = vmatpush1.msra.mxu0 0.0
    %154 = vmatprep.subr.mxu0 0.0
    %155 = vmatpush1.msra.mxu0 0.0
    %156 = vmatprep.subr.mxu0 0.0
    %157 = vmatpush1.msra.mxu0 0.0
    %158 = vmatprep.subr.mxu0 0.0
    %159 = vmatpush1.msra.mxu0 0.0
    %160 = vmatprep.subr.mxu0 0.0
    %161 = vmatpush1.msra.mxu0 0.0
    %162 = vmatprep.subr.mxu0 0.0
    %163 = vmatpush1.msra.mxu0 0.0
    %164 = vmatprep.subr.mxu0 0.0
    %165 = vmatpush1.msra.mxu0 0.0
    %166 = vmatprep.subr.mxu0 0.0
    %167 = vmatpush1.msra.mxu0 0.0
    %168 = vmatprep.subr.mxu0 0.0
    %169 = vmatpush1.msra.mxu0 0.0
    %170 = vmatprep.subr.mxu0 0.0
    %171 = vmatpush1.msra.mxu0 0.0
    %172 = vmatprep.subr.mxu0 0.0
    %173 = vmatpush1.msra.mxu0 0.0
    %174 = vmatprep.subr.mxu0 0.0
    %175 = vmatpush1.msra.mxu0 0.0
    %176 = vmatprep.subr.mxu0 0.0
    %177 = vmatpush1.msra.mxu0 0.0
    %178 = vmatprep.subr.mxu0 0.0
    %179 = vmatpush1.msra.mxu0 0.0
    %180 = vmatprep.subr.mxu0 0.0
    %181 = vmatpush1.msra.mxu0 0.0
    %182 = vmatprep.mubr.f32.mxu0 0.0
    %183 = vmatmul.mubr.f32.gmra.mrb[0].mxu0 %v95
    %v184 = vpop.f32.mrb[0].mxu0
    %v185 = vadd.f32 %v56, %v184
    %v186 = vpop.f32.mrb[0].mxu0
    %187 = vmatprep.mubr.f32.mxu0 0.0
    %188 = vmatmul.mubr.f32.gmra.mrb[0].mxu0 %v98
    %v189 = vpop.f32.mrb[0].mxu0
    %v190 = vadd.f32 %v61, %v189
    %v191 = vpop.f32.mrb[0].mxu0
    %192 = vmatprep.mubr.f32.mxu0 0.0
    %193 = vmatmul.mubr.f32.gmra.mrb[0].mxu0 %v101
    %v194 = vpop.f32.mrb[0].mxu0
    %v195 = vadd.f32 %v66, %v194
    %v196 = vpop.f32.mrb[0].mxu0
    %197 = vmatprep.mubr.f32.mxu0 0.0
    %198 = vmatmul.mubr.f32.gmra.mrb[0].mxu0 %v104
    %v199 = vpop.f32.mrb[0].mxu0
    %v200 = vadd.f32 %v71, %v199
    %v201 = vpop.f32.mrb[0].mxu0
    %202 = vmatprep.mubr.f32.mxu0 0.0
    %203 = vmatmul.mubr.f32.gmra.mrb[0].mxu0 %v107
    %v204 = vpop.f32.mrb[0].mxu0
    %v205 = vadd.f32 %v76, %v204
    %v206 = vpop.f32.mrb[0].mxu0
    %207 = vmatprep.mubr.f32.mxu0 0.0
    %208 = vmatmul.mubr.f32.gmra.mrb[0].mxu0 %v110
    %v209 = vpop.f32.mrb[0].mxu0
    %v210 = vadd.f32 %v81, %v209
    %v211 = vpop.f32.mrb[0].mxu0
    %212 = vmatprep.mubr.f32.mxu0 0.0
    %213 = vmatmul.mubr.f32.gmra.mrb[0].mxu0 %v113
    %v214 = vpop.f32.mrb[0].mxu0
    %v215 = vadd.f32 %v86, %v214
    %v216 = vpop.f32.mrb[0].mxu0
    %217 = vmatprep.mubr.f32.mxu0 0.0
    %218 = vmatmul.mubr.f32.gmra.mrb[0].mxu0 %v116
    %v219 = vpop.f32.mrb[0].mxu0
    %v220 = vadd.f32 %v91, %v219
    %v221 = vpop.f32.mrb[0].mxu0
    %222 = vdwg.mxu0
    %v223 = vmax.f32 %v185, 0.0
    %v224 = vmax.f32 %v190, 0.0
    %v225 = vmax.f32 %v195, 0.0
    %v226 = vmax.f32 %v200, 0.0
    %v227 = vmax.f32 %v205, 0.0
    %v228 = vmax.f32 %v210, 0.0
    %v229 = vmax.f32 %v215, 0.0
    %v230 = vmax.f32 %v220, 0.0
    %v231 = vld [vmem:[%s3] sm:$0xff]
    %v232 = vld [vmem:[%s3 + $0x8] sm:$0xff]
    %v233 = vld [vmem:[%s3 + $0x10] sm:$0xff]
    %v234 = vld [vmem:[%s3 + $0x18] sm:$0xff]
    %v235 = vld [vmem:[%s4] sm:$0xff]
    %v236 = vld [vmem:[%s4 + $0x8] sm:$0xff]
    %v237 = vld [vmem:[%s4 + $0x10] sm:$0xff]
    %v238 = vld [vmem:[%s4 + $0x18] sm:$0xff]
    %240 = vset.pattern.permute.xlu0 0
    %241 = vperm.xlu0 %240, %v235
    %v242 = vpop.permute.xlu0 %241
    %245 = vset.pattern.permute.xlu0 0
    %246 = vperm.xlu0 %245, %v236
    %v247 = vpop.permute.xlu0 %246
    %250 = vset.pattern.permute.xlu0 0
    %251 = vperm.xlu0 %250, %v237
    %v252 = vpop.permute.xlu0 %251
    %255 = vset.pattern.permute.xlu0 0
    %256 = vperm.xlu0 %255, %v238
    %v257 = vpop.permute.xlu0 %256
    %vm259 = vcmask 523264
    %v261 = vsel %vm259, %v231, 0
    %v264 = vsel %vm259, %v232, 0
    %v267 = vsel %vm259, %v233, 0
    %v270 = vsel %vm259, %v234, 0
    %272 = vmatprep.subr.mxu0 0.0
    %273 = vmatpush1.msra.mxu0 %v223
    %274 = vmatprep.subr.mxu0 0.0
    %275 = vmatpush1.msra.mxu0 %v224
    %276 = vmatprep.subr.mxu0 0.0
    %277 = vmatpush1.msra.mxu0 %v225
    %278 = vmatprep.subr.mxu0 0.0
    %279 = vmatpush1.msra.mxu0 %v226
    %280 = vmatprep.subr.mxu0 0.0
    %281 = vmatpush1.msra.mxu0 %v227
    %282 = vmatprep.subr.mxu0 0.0
    %283 = vmatpush1.msra.mxu0 %v228
    %284 = vmatprep.subr.mxu0 0.0
    %285 = vmatpush1.msra.mxu0 %v229
    %286 = vmatprep.subr.mxu0 0.0
    %287 = vmatpush1.msra.mxu0 %v230
    %288 = vmatprep.subr.mxu0 0.0
    %289 = vmatpush1.msra.mxu0 0.0
    %290 = vmatprep.subr.mxu0 0.0
    %291 = vmatpush1.msra.mxu0 0.0
    %292 = vmatprep.subr.mxu0 0.0
    %293 = vmatpush1.msra.mxu0 0.0
    %294 = vmatprep.subr.mxu0 0.0
    %295 = vmatpush1.msra.mxu0 0.0
    %296 = vmatprep.subr.mxu0 0.0
    %297 = vmatpush1.msra.mxu0 0.0
    %298 = vmatprep.subr.mxu0 0.0
    %299 = vmatpush1.msra.mxu0 0.0
    %300 = vmatprep.subr.mxu0 0.0
    %301 = vmatpush1.msra.mxu0 0.0
    %302 = vmatprep.subr.mxu0 0.0
    %303 = vmatpush1.msra.mxu0 0.0
    %304 = vmatprep.subr.mxu0 0.0
    %305 = vmatpush1.msra.mxu0 0.0
    %306 = vmatprep.subr.mxu0 0.0
    %307 = vmatpush1.msra.mxu0 0.0
    %308 = vmatprep.subr.mxu0 0.0
    %309 = vmatpush1.msra.mxu0 0.0
    %310 = vmatprep.subr.mxu0 0.0
    %311 = vmatpush1.msra.mxu0 0.0
    %312 = vmatprep.subr.mxu0 0.0
    %313 = vmatpush1.msra.mxu0 0.0
    %314 = vmatprep.subr.mxu0 0.0
    %315 = vmatpush1.msra.mxu0 0.0
    %316 = vmatprep.subr.mxu0 0.0
    %317 = vmatpush1.msra.mxu0 0.0
    %318 = vmatprep.subr.mxu0 0.0
    %319 = vmatpush1.msra.mxu0 0.0
    %320 = vmatprep.subr.mxu0 0.0
    %321 = vmatpush1.msra.mxu0 0.0
    %322 = vmatprep.subr.mxu0 0.0
    %323 = vmatpush1.msra.mxu0 0.0
    %324 = vmatprep.subr.mxu0 0.0
    %325 = vmatpush1.msra.mxu0 0.0
    %326 = vmatprep.subr.mxu0 0.0
    %327 = vmatpush1.msra.mxu0 0.0
    %328 = vmatprep.subr.mxu0 0.0
    %329 = vmatpush1.msra.mxu0 0.0
    %330 = vmatprep.subr.mxu0 0.0
    %331 = vmatpush1.msra.mxu0 0.0
    %332 = vmatprep.subr.mxu0 0.0
    %333 = vmatpush1.msra.mxu0 0.0
    %334 = vmatprep.subr.mxu0 0.0
    %335 = vmatpush1.msra.mxu0 0.0
    %336 = vmatprep.mubr.f32.mxu0 0.0
    %337 = vmatmul.mubr.f32.gmra.mrb[0].mxu0 %v261
    %v338 = vpop.f32.mrb[0].mxu0
    %v339 = vadd.f32 %v242, %v338
    %v340 = vpop.f32.mrb[0].mxu0
    %341 = vmatprep.mubr.f32.mxu0 0.0
    %342 = vmatmul.mubr.f32.gmra.mrb[0].mxu0 %v264
    %v343 = vpop.f32.mrb[0].mxu0
    %v344 = vadd.f32 %v247, %v343
    %v345 = vpop.f32.mrb[0].mxu0
    %346 = vmatprep.mubr.f32.mxu0 0.0
    %347 = vmatmul.mubr.f32.gmra.mrb[0].mxu0 %v267
    %v348 = vpop.f32.mrb[0].mxu0
    %v349 = vadd.f32 %v252, %v348
    %v350 = vpop.f32.mrb[0].mxu0
    %351 = vmatprep.mubr.f32.mxu0 0.0
    %352 = vmatmul.mubr.f32.gmra.mrb[0].mxu0 %v270
    %v353 = vpop.f32.mrb[0].mxu0
    %v354 = vadd.f32 %v257, %v353
    %v355 = vpop.f32.mrb[0].mxu0
    %356 = vdwg.mxu0
    %v357 = vmax.f32 %v339, 0.0
    %v358 = vmax.f32 %v344, 0.0
    %v359 = vmax.f32 %v349, 0.0
    %v360 = vmax.f32 %v354, 0.0
    %v361 = vld [vmem:[%s5] sm:$0xff]
    %v362 = vld [vmem:[%s5 + $0x8] sm:$0xff]
    %v363 = vld [vmem:[%s5 + $0x10] sm:$0xff]
    %v364 = vld [vmem:[%s5 + $0x18] sm:$0xff]
    %v365 = vld [vmem:[%s6] sm:$0xff]
    %v366 = vld [vmem:[%s6 + $0x8] sm:$0xff]
    %v367 = vld [vmem:[%s6 + $0x10] sm:$0xff]
    %v368 = vld [vmem:[%s6 + $0x18] sm:$0xff]
    %370 = vset.pattern.permute.xlu0 0
    %371 = vperm.xlu0 %370, %v365
    %v372 = vpop.permute.xlu0 %371
    %375 = vset.pattern.permute.xlu0 0
    %376 = vperm.xlu0 %375, %v366
    %v377 = vpop.permute.xlu0 %376
    %380 = vset.pattern.permute.xlu0 0
    %381 = vperm.xlu0 %380, %v367
    %v382 = vpop.permute.xlu0 %381
    %385 = vset.pattern.permute.xlu0 0
    %386 = vperm.xlu0 %385, %v368
    %v387 = vpop.permute.xlu0 %386
    %vm389 = vcmask 261120
    %v391 = vsel %vm389, %v361, 0
    %v394 = vsel %vm389, %v362, 0
    %v397 = vsel %vm389, %v363, 0
    %v400 = vsel %vm389, %v364, 0
    %402 = vmatprep.subr.mxu0 0.0
    %403 = vmatpush1.msra.mxu0 %v357
    %404 = vmatprep.subr.mxu0 0.0
    %405 = vmatpush1.msra.mxu0 %v358
    %406 = vmatprep.subr.mxu0 0.0
    %407 = vmatpush1.msra.mxu0 %v359
    %408 = vmatprep.subr.mxu0 0.0
    %409 = vmatpush1.msra.mxu0 %v360
    %410 = vmatprep.subr.mxu0 0.0
    %411 = vmatpush1.msra.mxu0 0.0
    %412 = vmatprep.subr.mxu0 0.0
    %413 = vmatpush1.msra.mxu0 0.0
    %414 = vmatprep.subr.mxu0 0.0
    %415 = vmatpush1.msra.mxu0 0.0
    %416 = vmatprep.subr.mxu0 0.0
    %417 = vmatpush1.msra.mxu0 0.0
    %418 = vmatprep.subr.mxu0 0.0
    %419 = vmatpush1.msra.mxu0 0.0
    %420 = vmatprep.subr.mxu0 0.0
    %421 = vmatpush1.msra.mxu0 0.0
    %422 = vmatprep.subr.mxu0 0.0
    %423 = vmatpush1.msra.mxu0 0.0
    %424 = vmatprep.subr.mxu0 0.0
    %425 = vmatpush1.msra.mxu0 0.0
    %426 = vmatprep.subr.mxu0 0.0
    %427 = vmatpush1.msra.mxu0 0.0
    %428 = vmatprep.subr.mxu0 0.0
    %429 = vmatpush1.msra.mxu0 0.0
    %430 = vmatprep.subr.mxu0 0.0
    %431 = vmatpush1.msra.mxu0 0.0
    %432 = vmatprep.subr.mxu0 0.0
    %433 = vmatpush1.msra.mxu0 0.0
    %434 = vmatprep.subr.mxu0 0.0
    %435 = vmatpush1.msra.mxu0 0.0
    %436 = vmatprep.subr.mxu0 0.0
    %437 = vmatpush1.msra.mxu0 0.0
    %438 = vmatprep.subr.mxu0 0.0
    %439 = vmatpush1.msra.mxu0 0.0
    %440 = vmatprep.subr.mxu0 0.0
    %441 = vmatpush1.msra.mxu0 0.0
    %442 = vmatprep.subr.mxu0 0.0
    %443 = vmatpush1.msra.mxu0 0.0
    %444 = vmatprep.subr.mxu0 0.0
    %445 = vmatpush1.msra.mxu0 0.0
    %446 = vmatprep.subr.mxu0 0.0
    %447 = vmatpush1.msra.mxu0 0.0
    %448 = vmatprep.subr.mxu0 0.0
    %449 = vmatpush1.msra.mxu0 0.0
    %450 = vmatprep.subr.mxu0 0.0
    %451 = vmatpush1.msra.mxu0 0.0
    %452 = vmatprep.subr.mxu0 0.0
    %453 = vmatpush1.msra.mxu0 0.0
    %454 = vmatprep.subr.mxu0 0.0
    %455 = vmatpush1.msra.mxu0 0.0
    %456 = vmatprep.subr.mxu0 0.0
    %457 = vmatpush1.msra.mxu0 0.0
    %458 = vmatprep.subr.mxu0 0.0
    %459 = vmatpush1.msra.mxu0 0.0
    %460 = vmatprep.subr.mxu0 0.0
    %461 = vmatpush1.msra.mxu0 0.0
    %462 = vmatprep.subr.mxu0 0.0
    %463 = vmatpush1.msra.mxu0 0.0
    %464 = vmatprep.subr.mxu0 0.0
    %465 = vmatpush1.msra.mxu0 0.0
    %466 = vmatprep.mubr.f32.mxu0 0.0
    %467 = vmatmul.mubr.f32.gmra.mrb[0].mxu0 %v391
    %v468 = vpop.f32.mrb[0].mxu0
    %v469 = vadd.f32 %v372, %v468
    %v470 = vpop.f32.mrb[0].mxu0
    %471 = vmatprep.mubr.f32.mxu0 0.0
    %472 = vmatmul.mubr.f32.gmra.mrb[0].mxu0 %v394
    %v473 = vpop.f32.mrb[0].mxu0
    %v474 = vadd.f32 %v377, %v473
    %v475 = vpop.f32.mrb[0].mxu0
    %476 = vmatprep.mubr.f32.mxu0 0.0
    %477 = vmatmul.mubr.f32.gmra.mrb[0].mxu0 %v397
    %v478 = vpop.f32.mrb[0].mxu0
    %v479 = vadd.f32 %v382, %v478
    %v480 = vpop.f32.mrb[0].mxu0
    %481 = vmatprep.mubr.f32.mxu0 0.0
    %482 = vmatmul.mubr.f32.gmra.mrb[0].mxu0 %v400
    %v483 = vpop.f32.mrb[0].mxu0
    %v484 = vadd.f32 %v387, %v483
    %v485 = vpop.f32.mrb[0].mxu0
    %486 = vdwg.mxu0
    %v487 = vmax.f32 %v469, 0.0
    %v488 = vmax.f32 %v474, 0.0
    %v489 = vmax.f32 %v479, 0.0
    %v490 = vmax.f32 %v484, 0.0
    %v491 = vld [vmem:[%s7] sm:$0x1]
    %v492 = vld [vmem:[#allocation2] sm:$0x1]
    %494 = vset.pattern.permute.xlu0 0
    %495 = vperm.xlu0 %494, %v492
    %v496 = vpop.permute.xlu0 %495
    %v498 = vlaneseq
    %v499 = vshrl.u32 %v498, 7
    %v500 = vsub.s32 0, %v499
    %v501 = vrot.slane %v496, %v500
    %v503 = vsel %vm389, %v491, 0
    %505 = vmatprep.subr.mxu0 0.0
    %506 = vmatpush1.msra.mxu0 %v487
    %507 = vmatprep.subr.mxu0 0.0
    %508 = vmatpush1.msra.mxu0 %v488
    %509 = vmatprep.subr.mxu0 0.0
    %510 = vmatpush1.msra.mxu0 %v489
    %511 = vmatprep.subr.mxu0 0.0
    %512 = vmatpush1.msra.mxu0 %v490
    %513 = vmatprep.subr.mxu0 0.0
    %514 = vmatpush1.msra.mxu0 0.0
    %515 = vmatprep.subr.mxu0 0.0
    %516 = vmatpush1.msra.mxu0 0.0
    %517 = vmatprep.subr.mxu0 0.0
    %518 = vmatpush1.msra.mxu0 0.0
    %519 = vmatprep.subr.mxu0 0.0
    %520 = vmatpush1.msra.mxu0 0.0
    %521 = vmatprep.subr.mxu0 0.0
    %522 = vmatpush1.msra.mxu0 0.0
    %523 = vmatprep.subr.mxu0 0.0
    %524 = vmatpush1.msra.mxu0 0.0
    %525 = vmatprep.subr.mxu0 0.0
    %526 = vmatpush1.msra.mxu0 0.0
    %527 = vmatprep.subr.mxu0 0.0
    %528 = vmatpush1.msra.mxu0 0.0
    %529 = vmatprep.subr.mxu0 0.0
    %530 = vmatpush1.msra.mxu0 0.0
    %531 = vmatprep.subr.mxu0 0.0
    %532 = vmatpush1.msra.mxu0 0.0
    %533 = vmatprep.subr.mxu0 0.0
    %534 = vmatpush1.msra.mxu0 0.0
    %535 = vmatprep.subr.mxu0 0.0
    %536 = vmatpush1.msra.mxu0 0.0
    %537 = vmatprep.subr.mxu0 0.0
    %538 = vmatpush1.msra.mxu0 0.0
    %539 = vmatprep.subr.mxu0 0.0
    %540 = vmatpush1.msra.mxu0 0.0
    %541 = vmatprep.subr.mxu0 0.0
    %542 = vmatpush1.msra.mxu0 0.0
    %543 = vmatprep.subr.mxu0 0.0
    %544 = vmatpush1.msra.mxu0 0.0
    %545 = vmatprep.subr.mxu0 0.0
    %546 = vmatpush1.msra.mxu0 0.0
    %547 = vmatprep.subr.mxu0 0.0
    %548 = vmatpush1.msra.mxu0 0.0
    %549 = vmatprep.subr.mxu0 0.0
    %550 = vmatpush1.msra.mxu0 0.0
    %551 = vmatprep.subr.mxu0 0.0
    %552 = vmatpush1.msra.mxu0 0.0
    %553 = vmatprep.subr.mxu0 0.0
    %554 = vmatpush1.msra.mxu0 0.0
    %555 = vmatprep.subr.mxu0 0.0
    %556 = vmatpush1.msra.mxu0 0.0
    %557 = vmatprep.subr.mxu0 0.0
    %558 = vmatpush1.msra.mxu0 0.0
    %559 = vmatprep.subr.mxu0 0.0
    %560 = vmatpush1.msra.mxu0 0.0
    %561 = vmatprep.subr.mxu0 0.0
    %562 = vmatpush1.msra.mxu0 0.0
    %563 = vmatprep.subr.mxu0 0.0
    %564 = vmatpush1.msra.mxu0 0.0
    %565 = vmatprep.subr.mxu0 0.0
    %566 = vmatpush1.msra.mxu0 0.0
    %567 = vmatprep.subr.mxu0 0.0
    %568 = vmatpush1.msra.mxu0 0.0
    %569 = vmatprep.mubr.f32.mxu0 0.0
    %570 = vmatmul.mubr.f32.gmra.mrb[0].mxu0 %v503
    %v571 = vpop.f32.mrb[0].mxu0
    %v572 = vadd.f32 %v501, %v571
    %v573 = vpop.f32.mrb[0].mxu0
    %574 = vdwg.mxu0
    %575 = vst [vmem:[#allocation3] sm:$0x1] %v572
    // Predicated region
    $region38: #{tpu_custom_call.1} parent=1 // pred_check
      _
    $region39: #{tpu_custom_call.1} parent=1 // pred_check_branch
      %577 = sbr.rel (0) target = $region41
    $region40: #{tpu_custom_call.1} parent=1 // pred_region
      %s579 = ssub.s32 16, 16
      %580 = vsyncadd [#allocation4], %s579
      %s582 = sshll.u32 [#allocation3], 4
      %s583 = int_to_ptr.vmem [resolvable:$true] %s582
      %585 = dma.vmem_to_hbm [thread:$0]  %s583, 16, %s9, [#allocation4]
    $region41: #{tpu_custom_call.1} parent=1 // pred_fallthru
      _
    // Predicated region
    $region42: #{tpu_custom_call.1} parent=1 // pred_check
      _
    $region43: #{tpu_custom_call.1} parent=1 // pred_check_branch
      %587 = sbr.rel (0) target = $region45
    $region44: #{tpu_custom_call.1} parent=1 // pred_region
      %588 = dma.done [#allocation4], 16
    $region45: #{tpu_custom_call.1} parent=1 // pred_fallthru
      _
    %589 = vsyncpa [#allocation4], 1

</llo_original>
